<compile_context>
chip_gen: v7x
topology: tpu7x:2x2x1
jax: 0.10.0
libtpu: 0.0.40
codegen_flags: <defaults>
</compile_context>

<pallas_src>
import math
import jax
import jax.numpy as jnp
from jax.experimental import pallas as pl
from jax.experimental.pallas import tpu as pltpu


def outconv_kernel(x_ref, w_ref, b_ref, o_ref):
    # x_ref: (NB, Cin, TL)  w_ref: (Cout, Cin)  b_ref: (Cout, 1)  o_ref: (NB, Cout, TL)
    nb = x_ref.shape[0]
    w = w_ref[...]
    b = b_ref[...]
    for i in range(nb):  # static, small (NB <= 8); one MXU matmul per row
        y = jnp.dot(w, x_ref[i], preferred_element_type=jnp.float32)  # (Cout, TL) f32
        o_ref[i] = (y + b).astype(o_ref.dtype)


def _choose_tiles(N, Cin, Cout, L, itemsize):
    """Pick (NB, TL) so double-buffered x+out tiles stay well under scoped VMEM."""
    budget = 8 * 1024 * 1024  # bytes for double-buffered (x + out) tiles, per batch row
    if L < 128:
        TL = L  # block dim equal to full array dim is always legal
    else:
        max_tl = budget // max((Cin + Cout) * itemsize * 2, 1)
        TL = min((L // 128) * 128, 8192, max(128, (max_tl // 128) * 128))
    per_batch = (Cin + Cout) * TL * itemsize * 2
    NB = max(1, min(N, 8, budget // max(per_batch, 1)))
    return int(NB), int(TL)


def init_outconv_params(key, in_channels, out_channels):
    """Matches nn.Conv1d(kernel_size=1) default init (weight squeezed to 2-D)."""
    kw, kb = jax.random.split(key)
    bound = 1.0 / math.sqrt(in_channels * 1)
    w = jax.random.uniform(kw, (out_channels, in_channels), jnp.float32, -bound, bound)
    b = jax.random.uniform(kb, (out_channels, 1), jnp.float32, -bound, bound)
    return dict(w=w, b=b)


def outconv_forward(params, x):
    """x: (N, Cin, L) in PyTorch NCL layout. Returns (N, Cout, L) in x.dtype."""
    w, b = params["w"], params["b"]  # (Cout, Cin), (Cout, 1)
    N, Cin, L = x.shape
    Cout = w.shape[0]
    assert w.shape[1] == Cin

    itemsize = jnp.dtype(x.dtype).itemsize
    NB, TL = _choose_tiles(N, Cin, Cout, L, itemsize)
    grid = (pl.cdiv(N, NB), pl.cdiv(L, TL))

    out_dtype = x.dtype
    cost = pl.CostEstimate(
        flops=2 * N * Cout * Cin * L,
        transcendentals=0,
        bytes_accessed=(N * Cin * L * itemsize
                        + Cout * Cin * 4 + Cout * 4
                        + N * Cout * L * jnp.dtype(out_dtype).itemsize),
    )

    return pl.pallas_call(
        outconv_kernel,
        out_shape=jax.ShapeDtypeStruct((N, Cout, L), out_dtype),
        grid_spec=pltpu.PrefetchScalarGridSpec(
            num_scalar_prefetch=0,
            grid=grid,
            in_specs=[
                pl.BlockSpec((NB, Cin, TL), lambda n, l: (n, 0, l)),  # x tile
                pl.BlockSpec((Cout, Cin), lambda n, l: (0, 0)),       # weight (resident)
                pl.BlockSpec((Cout, 1),   lambda n, l: (0, 0)),       # bias (resident)
            ],
            out_specs=pl.BlockSpec((NB, Cout, TL), lambda n, l: (n, 0, l)),
        ),
        compiler_params=pltpu.CompilerParams(
            dimension_semantics=("parallel", "parallel"),
            vmem_limit_bytes=32 * 1024 * 1024,
        ),
        cost_estimate=cost,
    )(x, w, b)


if __name__ == "__main__":
    key = jax.random.PRNGKey(0)
    k_x, k_p = jax.random.split(key)

    # Small shapes consistent with the module: batch=2, in_channels=16,
    # out_channels=8, sequence length=256.
    N, Cin, Cout, L = 2, 16, 8, 256
    x = jax.random.normal(k_x, (N, Cin, L), jnp.float32)
    params = init_outconv_params(k_p, Cin, Cout)

    out = outconv_forward(params, x)
    jax.block_until_ready(out)

    # Pure-JAX reference of Conv1d(kernel_size=1) forward.
    ref = jnp.einsum("oc,ncl->nol", params["w"], x) + params["b"].reshape(1, Cout, 1)
    assert out.shape == (N, Cout, L)
    assert out.dtype == x.dtype
    assert bool(jnp.all(jnp.isfinite(out)))
    assert bool(jnp.max(jnp.abs(out.astype(jnp.float32) - ref)) < 1e-4)
    print("KERNEL_OK")
</pallas_src>

<mosaic_0001>
module attributes {stable_mosaic.version = 11 : i64} {
  func.func @outconv_kernel(%arg0: i32, %arg1: i32, %arg2: memref<2x16x256xf32, #tpu.memory_space<vmem>>, %arg3: memref<8x16xf32, #tpu.memory_space<vmem>>, %arg4: memref<8x1xf32, #tpu.memory_space<vmem>>, %arg5: memref<2x8x256xf32, #tpu.memory_space<vmem>>) attributes {dimension_semantics = [#tpu.dimension_semantics<parallel>, #tpu.dimension_semantics<parallel>], iteration_bounds = array<i64: 1, 1>, scalar_prefetch = 0 : i64, scratch_operands = 0 : i64, tpu.core_type = #tpu.core_type<tc>, window_params = [{transform_indices = @transform_0, window_bounds = array<i64: 2, 16, 256>}, {pipeline_mode = #tpu.pipeline_mode<synchronous>, transform_indices = @transform_1, window_bounds = array<i64: 8, 16>}, {pipeline_mode = #tpu.pipeline_mode<synchronous>, transform_indices = @transform_2, window_bounds = array<i64: 8, 1>}, {transform_indices = @transform_3, window_bounds = array<i64: 2, 8, 256>}]} {
    %c0 = arith.constant 0 : index
    %c0_0 = arith.constant 0 : index
    %0 = vector.load %arg3[%c0, %c0_0] : memref<8x16xf32, #tpu.memory_space<vmem>>, vector<8x16xf32>
    %c0_1 = arith.constant 0 : index
    %c0_2 = arith.constant 0 : index
    %1 = vector.load %arg4[%c0_1, %c0_2] : memref<8x1xf32, #tpu.memory_space<vmem>>, vector<8x1xf32>
    %c0_3 = arith.constant 0 : index
    %c0_4 = arith.constant 0 : index
    %c0_5 = arith.constant 0 : index
    %2 = vector.load %arg2[%c0_3, %c0_4, %c0_5] : memref<2x16x256xf32, #tpu.memory_space<vmem>>, vector<1x16x256xf32>
    %3 = vector.shape_cast %2 : vector<1x16x256xf32> to vector<16x256xf32>
    %cst = arith.constant dense<0.000000e+00> : vector<8x256xf32>
    %4 = tpu.matmul %0, %3, %cst {dimension_numbers = #tpu.dot_dimension_numbers<[1], [0], [0], [1], [0, 0, 1, 1], [], []>} : vector<8x16xf32>, vector<16x256xf32>, vector<8x256xf32> -> vector<8x256xf32>
    %5 = vector.broadcast %1 : vector<8x1xf32> to vector<8x256xf32>
    %6 = arith.addf %4, %5 : vector<8x256xf32>
    %c0_6 = arith.constant 0 : index
    %c0_7 = arith.constant 0 : index
    %c0_8 = arith.constant 0 : index
    %7 = vector.load %arg5[%c0_6, %c0_7, %c0_8] : memref<2x8x256xf32, #tpu.memory_space<vmem>>, vector<1x8x256xf32>
    %8 = vector.shape_cast %7 : vector<1x8x256xf32> to vector<8x256xf32>
    %9 = vector.shape_cast %6 : vector<8x256xf32> to vector<1x8x256xf32>
    tpu.vector_store %arg5[%c0_6, %c0_7, %c0_8], %9 {strides = array<i32>} : memref<2x8x256xf32, #tpu.memory_space<vmem>>, vector<1x8x256xf32>,
    %c1 = arith.constant 1 : index
    %c0_9 = arith.constant 0 : index
    %c0_10 = arith.constant 0 : index
    %10 = vector.load %arg2[%c1, %c0_9, %c0_10] : memref<2x16x256xf32, #tpu.memory_space<vmem>>, vector<1x16x256xf32>
    %11 = vector.shape_cast %10 : vector<1x16x256xf32> to vector<16x256xf32>
    %cst_11 = arith.constant dense<0.000000e+00> : vector<8x256xf32>
    %12 = tpu.matmul %0, %11, %cst_11 {dimension_numbers = #tpu.dot_dimension_numbers<[1], [0], [0], [1], [0, 0, 1, 1], [], []>} : vector<8x16xf32>, vector<16x256xf32>, vector<8x256xf32> -> vector<8x256xf32>
    %13 = vector.broadcast %1 : vector<8x1xf32> to vector<8x256xf32>
    %14 = arith.addf %12, %13 : vector<8x256xf32>
    %c1_12 = arith.constant 1 : index
    %c0_13 = arith.constant 0 : index
    %c0_14 = arith.constant 0 : index
    %15 = vector.load %arg5[%c1_12, %c0_13, %c0_14] : memref<2x8x256xf32, #tpu.memory_space<vmem>>, vector<1x8x256xf32>
    %16 = vector.shape_cast %15 : vector<1x8x256xf32> to vector<8x256xf32>
    %17 = vector.shape_cast %14 : vector<8x256xf32> to vector<1x8x256xf32>
    tpu.vector_store %arg5[%c1_12, %c0_13, %c0_14], %17 {strides = array<i32>} : memref<2x8x256xf32, #tpu.memory_space<vmem>>, vector<1x8x256xf32>,
    return
  }
  func.func @transform_0(%arg0: i32, %arg1: i32) -> (i32, i32, i32) {
    %c0_i32 = arith.constant 0 : i32
    %c0_i32_0 = arith.constant 0 : i32
    return %arg0, %c0_i32, %arg1 : i32, i32, i32
  }
  func.func @transform_1(%arg0: i32, %arg1: i32) -> (i32, i32) {
    %c0_i32 = arith.constant 0 : i32
    %c0_i32_0 = arith.constant 0 : i32
    %c0_i32_1 = arith.constant 0 : i32
    return %c0_i32, %c0_i32_0 : i32, i32
  }
  func.func @transform_2(%arg0: i32, %arg1: i32) -> (i32, i32) {
    %c0_i32 = arith.constant 0 : i32
    %c0_i32_0 = arith.constant 0 : i32
    %c0_i32_1 = arith.constant 0 : i32
    return %c0_i32, %c0_i32_0 : i32, i32
  }
  func.func @transform_3(%arg0: i32, %arg1: i32) -> (i32, i32, i32) {
    %c0_i32 = arith.constant 0 : i32
    %c0_i32_0 = arith.constant 0 : i32
    return %arg0, %c0_i32, %arg1 : i32, i32, i32
  }
}

</mosaic_0001>

<llo_original>
// kernel: tpu_custom_call.1
$region0: #{tpu_custom_call.1}
  #allocation0 [shape = 'u32[]', space=smem, size = 0x4, offset = 0x4, fixed_abs, tag = 'smem constant byte address 0x4 - core index']
  #allocation1 [shape = 'u32[144,128]{1,0:T(1,128)}', space=vmem, size = 0x12000, scoped, tag = 'internal scratch']
  %s0 = inlined_call_operand.hbm [shape: f32[2,16,256], index: 0, kind: input, shape index: {}]
  %s1 = inlined_call_operand.vmem [shape: f32[8,16], index: 1, kind: input, shape index: {}]
  %s2 = inlined_call_operand.vmem [shape: f32[8,1], index: 2, kind: input, shape index: {}]
  %s3 = inlined_call_operand.hbm [shape: f32[2,8,256], index: 3, kind: output, shape index: {}]
  %s4 = sld [smem:[#allocation0]]
  $region26: #{tpu_custom_call.1} parent=0
    _
  %s6 = ssub.s32 1, %s4
  %s7 = scalar_select 0, %s6, %s4
  $region1: #{tpu_custom_call.1} parent=0
    #allocation2 [shape = 'u8[32768]{0}', space=vmem, size = 0x8000, scoped, tag = 'input window, operand 0, single buffered']
    #allocation3 [shape = 's32[1]{0}', space=sflag, size = 0x4, scoped, tag = 'scoped memory for tpu_custom_call.1']
    #allocation4 [shape = 's32[1]{0}', space=sflag, size = 0x4, scoped, tag = 'scoped memory for tpu_custom_call.1']
    #allocation5 [shape = 'u8[16384]{0}', space=vmem, size = 0x4000, scoped, tag = 'output window, operand 0, single buffered']
    %8 = vsyncpa [#allocation3], 0
    %9 = vsyncpa [#allocation4], 0
    // Predicated region
    $region2: #{tpu_custom_call.1} parent=1 // pred_check
      _
    $region3: #{tpu_custom_call.1} parent=1 // pred_check_branch
      %11 = sbr.rel (0) target = $region5
    $region4: #{tpu_custom_call.1} parent=1 // pred_region
      %s13 = ssub.s32 1024, 1024
      %14 = vsyncadd [#allocation3], %s13
      %s15 = sshll.u32 [#allocation2], 4
      %s16 = int_to_ptr.vmem [resolvable:$true] %s15
      %21 = dma.hbm_to_vmem [thread:$0]  %s0, 1024, %s16, [#allocation3], 256, 256, 16
    $region5: #{tpu_custom_call.1} parent=1 // pred_fallthru
      _
    // Predicated region
    $region6: #{tpu_custom_call.1} parent=1 // pred_check
      _
    $region7: #{tpu_custom_call.1} parent=1 // pred_check_branch
      %23 = sbr.rel (0) target = $region9
    $region8: #{tpu_custom_call.1} parent=1 // pred_region
      _
    $region9: #{tpu_custom_call.1} parent=1 // pred_fallthru
      _
    // Predicated region
    $region10: #{tpu_custom_call.1} parent=1 // pred_check
      _
    $region11: #{tpu_custom_call.1} parent=1 // pred_check_branch
      %25 = sbr.rel (0) target = $region13
    $region12: #{tpu_custom_call.1} parent=1 // pred_region
      _
    $region13: #{tpu_custom_call.1} parent=1 // pred_fallthru
      _
    // Predicated region
    $region14: #{tpu_custom_call.1} parent=1 // pred_check
      _
    $region15: #{tpu_custom_call.1} parent=1 // pred_check_branch
      %27 = sbr.rel (0) target = $region17
    $region16: #{tpu_custom_call.1} parent=1 // pred_region
      %28 = dma.done [#allocation3], 1024
    $region17: #{tpu_custom_call.1} parent=1 // pred_fallthru
      _
    %v29 = vld [vmem:[%s1] sm:$0xff]
    %v30 = vld [vmem:[%s2] sm:$0xff]
    %v31 = vld [vmem:[#allocation2] sm:$0xff]
    %v32 = vld [vmem:[#allocation2 + $0x8] sm:$0xff]
    %v33 = vld [vmem:[#allocation2 + $0x10] sm:$0xff]
    %v34 = vld [vmem:[#allocation2 + $0x18] sm:$0xff]
    %36 = vset.pattern.permute.xlu0 0
    %37 = vperm.xlu0 %36, %v30
    %v38 = vpop.permute.xlu0 %37
    %vm40 = vcmask 130048
    %v42 = vsel %vm40, %v29, 0
    %44 = vmatprep.subr.mxu0 %v32
    %45 = vmatpush1.msra.mxu0 %v31
    %46 = vmatprep.subr.mxu0 %v34
    %47 = vmatpush1.msra.mxu0 %v33
    %48 = vmatprep.subr.mxu0 0.0
    %49 = vmatpush1.msra.mxu0 0.0
    %50 = vmatprep.subr.mxu0 0.0
    %51 = vmatpush1.msra.mxu0 0.0
    %52 = vmatprep.subr.mxu0 0.0
    %53 = vmatpush1.msra.mxu0 0.0
    %54 = vmatprep.subr.mxu0 0.0
    %55 = vmatpush1.msra.mxu0 0.0
    %56 = vmatprep.subr.mxu0 0.0
    %57 = vmatpush1.msra.mxu0 0.0
    %58 = vmatprep.subr.mxu0 0.0
    %59 = vmatpush1.msra.mxu0 0.0
    %60 = vmatprep.subr.mxu0 0.0
    %61 = vmatpush1.msra.mxu0 0.0
    %62 = vmatprep.subr.mxu0 0.0
    %63 = vmatpush1.msra.mxu0 0.0
    %64 = vmatprep.subr.mxu0 0.0
    %65 = vmatpush1.msra.mxu0 0.0
    %66 = vmatprep.subr.mxu0 0.0
    %67 = vmatpush1.msra.mxu0 0.0
    %68 = vmatprep.subr.mxu0 0.0
    %69 = vmatpush1.msra.mxu0 0.0
    %70 = vmatprep.subr.mxu0 0.0
    %71 = vmatpush1.msra.mxu0 0.0
    %72 = vmatprep.subr.mxu0 0.0
    %73 = vmatpush1.msra.mxu0 0.0
    %74 = vmatprep.subr.mxu0 0.0
    %75 = vmatpush1.msra.mxu0 0.0
    %76 = vmatprep.subr.mxu0 0.0
    %77 = vmatpush1.msra.mxu0 0.0
    %78 = vmatprep.subr.mxu0 0.0
    %79 = vmatpush1.msra.mxu0 0.0
    %80 = vmatprep.subr.mxu0 0.0
    %81 = vmatpush1.msra.mxu0 0.0
    %82 = vmatprep.subr.mxu0 0.0
    %83 = vmatpush1.msra.mxu0 0.0
    %84 = vmatprep.subr.mxu0 0.0
    %85 = vmatpush1.msra.mxu0 0.0
    %86 = vmatprep.subr.mxu0 0.0
    %87 = vmatpush1.msra.mxu0 0.0
    %88 = vmatprep.subr.mxu0 0.0
    %89 = vmatpush1.msra.mxu0 0.0
    %90 = vmatprep.subr.mxu0 0.0
    %91 = vmatpush1.msra.mxu0 0.0
    %92 = vmatprep.subr.mxu0 0.0
    %93 = vmatpush1.msra.mxu0 0.0
    %94 = vmatprep.subr.mxu0 0.0
    %95 = vmatpush1.msra.mxu0 0.0
    %96 = vmatprep.subr.mxu0 0.0
    %97 = vmatpush1.msra.mxu0 0.0
    %98 = vmatprep.subr.mxu0 0.0
    %99 = vmatpush1.msra.mxu0 0.0
    %100 = vmatprep.subr.mxu0 0.0
    %101 = vmatpush1.msra.mxu0 0.0
    %102 = vmatprep.subr.mxu0 0.0
    %103 = vmatpush1.msra.mxu0 0.0
    %104 = vmatprep.subr.mxu0 0.0
    %105 = vmatpush1.msra.mxu0 0.0
    %106 = vmatprep.subr.mxu0 0.0
    %107 = vmatpush1.msra.mxu0 0.0
    %108 = vmatprep.mubr.f32.mxu0 0.0
    %109 = vmatmul.mubr.f32.gmra.mrb[0].mxu0 %v42
    %v110 = vpop.f32.mrb[0].mxu0
    %v111 = vadd.f32 %v38, %v110
    %v112 = vpop.f32.mrb[0].mxu0
    %v113 = vadd.f32 %v38, %v112
    %114 = vdwg.mxu0
    %115 = vst [vmem:[#allocation5] sm:$0xff] %v111
    %116 = vst [vmem:[#allocation5 + $0x8] sm:$0xff] %v113
    %s117 = scalar_lea.vmem [#allocation2], 32
    %v118 = vld [vmem:[%s117] sm:$0xff]
    %v119 = vld [vmem:[%s117 + $0x8] sm:$0xff]
    %v120 = vld [vmem:[%s117 + $0x10] sm:$0xff]
    %v121 = vld [vmem:[%s117 + $0x18] sm:$0xff]
    %122 = vmatprep.subr.mxu0 %v119
    %123 = vmatpush1.msra.mxu0 %v118
    %124 = vmatprep.subr.mxu0 %v121
    %125 = vmatpush1.msra.mxu0 %v120
    %126 = vmatprep.subr.mxu0 0.0
    %127 = vmatpush1.msra.mxu0 0.0
    %128 = vmatprep.subr.mxu0 0.0
    %129 = vmatpush1.msra.mxu0 0.0
    %130 = vmatprep.subr.mxu0 0.0
    %131 = vmatpush1.msra.mxu0 0.0
    %132 = vmatprep.subr.mxu0 0.0
    %133 = vmatpush1.msra.mxu0 0.0
    %134 = vmatprep.subr.mxu0 0.0
    %135 = vmatpush1.msra.mxu0 0.0
    %136 = vmatprep.subr.mxu0 0.0
    %137 = vmatpush1.msra.mxu0 0.0
    %138 = vmatprep.subr.mxu0 0.0
    %139 = vmatpush1.msra.mxu0 0.0
    %140 = vmatprep.subr.mxu0 0.0
    %141 = vmatpush1.msra.mxu0 0.0
    %142 = vmatprep.subr.mxu0 0.0
    %143 = vmatpush1.msra.mxu0 0.0
    %144 = vmatprep.subr.mxu0 0.0
    %145 = vmatpush1.msra.mxu0 0.0
    %146 = vmatprep.subr.mxu0 0.0
    %147 = vmatpush1.msra.mxu0 0.0
    %148 = vmatprep.subr.mxu0 0.0
    %149 = vmatpush1.msra.mxu0 0.0
    %150 = vmatprep.subr.mxu0 0.0
    %151 = vmatpush1.msra.mxu0 0.0
    %152 = vmatprep.subr.mxu0 0.0
    %153 = vmatpush1.msra.mxu0 0.0
    %154 = vmatprep.subr.mxu0 0.0
    %155 = vmatpush1.msra.mxu0 0.0
    %156 = vmatprep.subr.mxu0 0.0
    %157 = vmatpush1.msra.mxu0 0.0
    %158 = vmatprep.subr.mxu0 0.0
    %159 = vmatpush1.msra.mxu0 0.0
    %160 = vmatprep.subr.mxu0 0.0
    %161 = vmatpush1.msra.mxu0 0.0
    %162 = vmatprep.subr.mxu0 0.0
    %163 = vmatpush1.msra.mxu0 0.0
    %164 = vmatprep.subr.mxu0 0.0
    %165 = vmatpush1.msra.mxu0 0.0
    %166 = vmatprep.subr.mxu0 0.0
    %167 = vmatpush1.msra.mxu0 0.0
    %168 = vmatprep.subr.mxu0 0.0
    %169 = vmatpush1.msra.mxu0 0.0
    %170 = vmatprep.subr.mxu0 0.0
    %171 = vmatpush1.msra.mxu0 0.0
    %172 = vmatprep.subr.mxu0 0.0
    %173 = vmatpush1.msra.mxu0 0.0
    %174 = vmatprep.subr.mxu0 0.0
    %175 = vmatpush1.msra.mxu0 0.0
    %176 = vmatprep.subr.mxu0 0.0
    %177 = vmatpush1.msra.mxu0 0.0
    %178 = vmatprep.subr.mxu0 0.0
    %179 = vmatpush1.msra.mxu0 0.0
    %180 = vmatprep.subr.mxu0 0.0
    %181 = vmatpush1.msra.mxu0 0.0
    %182 = vmatprep.subr.mxu0 0.0
    %183 = vmatpush1.msra.mxu0 0.0
    %184 = vmatprep.subr.mxu0 0.0
    %185 = vmatpush1.msra.mxu0 0.0
    %186 = vmatprep.mubr.f32.mxu0 0.0
    %187 = vmatmul.mubr.f32.gmra.mrb[0].mxu0 %v42
    %v188 = vpop.f32.mrb[0].mxu0
    %v189 = vadd.f32 %v38, %v188
    %v190 = vpop.f32.mrb[0].mxu0
    %v191 = vadd.f32 %v38, %v190
    %192 = vdwg.mxu0
    %s193 = scalar_lea.vmem [#allocation5], 16
    %194 = vst [vmem:[%s193] sm:$0xff] %v189
    %195 = vst [vmem:[%s193 + $0x8] sm:$0xff] %v191
    // Predicated region
    $region18: #{tpu_custom_call.1} parent=1 // pred_check
      _
    $region19: #{tpu_custom_call.1} parent=1 // pred_check_branch
      %197 = sbr.rel (0) target = $region21
    $region20: #{tpu_custom_call.1} parent=1 // pred_region
      %s199 = ssub.s32 512, 512
      %200 = vsyncadd [#allocation4], %s199
      %s201 = sshll.u32 [#allocation5], 4
      %s202 = int_to_ptr.vmem [resolvable:$true] %s201
      %207 = dma.vmem_to_hbm [thread:$0]  %s202, 512, %s3, [#allocation4], 256, 256, 16
    $region21: #{tpu_custom_call.1} parent=1 // pred_fallthru
      _
    // Predicated region
    $region22: #{tpu_custom_call.1} parent=1 // pred_check
      _
    $region23: #{tpu_custom_call.1} parent=1 // pred_check_branch
      %209 = sbr.rel (0) target = $region25
    $region24: #{tpu_custom_call.1} parent=1 // pred_region
      %210 = dma.done [#allocation4], 512
    $region25: #{tpu_custom_call.1} parent=1 // pred_fallthru
      _
    %211 = vsyncpa [#allocation3], 1
    %212 = vsyncpa [#allocation4], 1

</llo_original>
